<compile_context>
chip_gen: v6e
topology: v6e:2x2x1
jax: 0.10.0
libtpu: 0.0.40
codegen_flags: <defaults>
</compile_context>

<pallas_src>
import functools

import jax
import jax.numpy as jnp
from jax.experimental import pallas as pl
from jax.experimental.pallas import tpu as pltpu

EPS = 1e-6  # default eps of nn.PairwiseDistance


def cell_pair_loss_kernel(y_ref, yp_ref, yn_ref, out_ref, *, n_valid, tm):
    i = pl.program_id(0)

    y = y_ref[...].astype(jnp.float32)                           # (tm, D)
    dp = y - yp_ref[...].astype(jnp.float32) + EPS
    dn = y - yn_ref[...].astype(jnp.float32) + EPS
    pos_d = jnp.sqrt(jnp.sum(dp * dp, axis=-1, keepdims=True))   # (tm, 1)
    neg_d = jnp.sqrt(jnp.sum(dn * dn, axis=-1, keepdims=True))   # (tm, 1)

    # CE over [pos_d, neg_d], target class 1:
    #   loss_i = logsumexp([pos, neg]) - neg = softplus(pos - neg)
    x = pos_d - neg_d
    loss = jnp.maximum(x, 0.0) + jnp.log1p(jnp.exp(-jnp.abs(x)))  # (tm, 1)

    # Mask rows past the true N (partial last block contains garbage rows).
    row = i * tm + jax.lax.broadcasted_iota(jnp.int32, loss.shape, 0)
    loss = jnp.where(row < n_valid, loss, 0.0)

    # Per-tile partial sum, broadcast across 128 lanes (unmasked lane-dense
    # store); final reduction / mean happens in the wrapper.
    partial = jnp.sum(loss)
    out_ref[...] = jnp.full((1, 128), partial, dtype=jnp.float32)


def cell_pair_loss(y, pos_cell, neg_cell, *, row_tile=4096,
                   block_bytes_budget=2 * 1024 * 1024):
    n, d = y.shape

    # Stream the caller's dtype (bf16 halves HBM bytes); upcast inside kernel.
    itemsize = jnp.dtype(y.dtype).itemsize
    sub = max(8, 32 // itemsize)            # sublane alignment: 8 f32, 16 bf16

    # Row gather in the wrapper (memory-bound XLA gather), not one-hot matmul.
    pos_cell = pos_cell.astype(jnp.int32)
    neg_cell = neg_cell.astype(jnp.int32)
    y_pos = jnp.take(y, pos_cell, axis=0)
    y_neg = jnp.take(y, neg_cell, axis=0)

    # Tile size: ~MiB-scale blocks (HBM roofline), capped by a VMEM budget.
    d_pad = ((d + 127) // 128) * 128        # lane padding of the minor dim
    tm_vmem = max(sub, (block_bytes_budget // (d_pad * itemsize)) // sub * sub)
    n_round = ((n + sub - 1) // sub) * sub
    tm = max(sub, min(row_tile, tm_vmem, n_round))

    grid_m = pl.cdiv(n, tm)
    kernel = functools.partial(cell_pair_loss_kernel, n_valid=n, tm=tm)

    partials = pl.pallas_call(
        kernel,
        out_shape=jax.ShapeDtypeStruct((grid_m, 128), jnp.float32),
        grid=(grid_m,),
        in_specs=[
            pl.BlockSpec((tm, d), lambda i: (i, 0)),
            pl.BlockSpec((tm, d), lambda i: (i, 0)),
            pl.BlockSpec((tm, d), lambda i: (i, 0)),
        ],
        out_specs=pl.BlockSpec((1, 128), lambda i: (i, 0)),
        compiler_params=pltpu.CompilerParams(
            # Independent per-tile partial sums -> shardable across TCs (v7x).
            dimension_semantics=("parallel",),
            # Explicit budget: 3 inputs x 2 pipeline buffers x (tm, d_pad)
            # stays well under 32 MiB; raise above v5e's 16 MiB default.
            vmem_limit_bytes=32 * 1024 * 1024,
        ),
        cost_estimate=pl.CostEstimate(
            flops=8 * n * d,
            transcendentals=4 * n,           # 2x sqrt + exp + log1p per row
            bytes_accessed=3 * n * d * itemsize + grid_m * 128 * 4,
        ),
    )(y, y_pos, y_neg)

    return jnp.sum(partials[:, 0]) / n


def cell_pair_loss_reference(y, pos_cell, neg_cell):
    dp = y - y[pos_cell] + EPS
    dn = y - y[neg_cell] + EPS
    pos_d = jnp.sqrt(jnp.sum(dp * dp, axis=-1))
    neg_d = jnp.sqrt(jnp.sum(dn * dn, axis=-1))
    logits = jnp.stack([pos_d, neg_d], axis=-1)
    logz = jax.scipy.special.logsumexp(logits, axis=-1)
    return jnp.mean(logz - neg_d)


if __name__ == "__main__":
    key = jax.random.PRNGKey(0)

    # (N, D, dtype, row_tile): module-consistent small size; non-multiple-of-8
    # rows (partial-block masking); multi-tile grid with a partial last tile;
    # bf16 streaming with 16-row sublane alignment.
    cases = [
        (16, 32, jnp.float32, None),
        (19, 48, jnp.float32, None),
        (640, 64, jnp.float32, 256),
        (257, 128, jnp.bfloat16, 64),
    ]
    for (N, D, dt, rt) in cases:
        key, k1, k2, k3 = jax.random.split(key, 4)
        y = jax.random.normal(k1, (N, D), dtype=jnp.float32).astype(dt)
        pos_cell = jax.random.randint(k2, (N,), 0, N, dtype=jnp.int32)
        neg_cell = jax.random.randint(k3, (N,), 0, N, dtype=jnp.int32)

        kwargs = {} if rt is None else {"row_tile": rt}
        loss = jax.block_until_ready(
            cell_pair_loss(y, pos_cell, neg_cell, **kwargs))
        ref = cell_pair_loss_reference(
            y.astype(jnp.float32), pos_cell, neg_cell)
        assert jnp.allclose(loss, ref, rtol=1e-5, atol=1e-5), (
            N, D, dt, loss, ref)

    print("KERNEL_OK")
</pallas_src>

<mosaic_0001>
module attributes {stable_mosaic.version = 11 : i64} {
  func.func @cell_pair_loss_kernel(%arg0: i32, %arg1: memref<16x32xf32, #tpu.memory_space<vmem>>, %arg2: memref<16x32xf32, #tpu.memory_space<vmem>>, %arg3: memref<16x32xf32, #tpu.memory_space<vmem>>, %arg4: memref<1x128xf32, #tpu.memory_space<vmem>>) attributes {dimension_semantics = [#tpu.dimension_semantics<parallel>], iteration_bounds = array<i64: 1>, scalar_prefetch = 0 : i64, scratch_operands = 0 : i64, tpu.core_type = #tpu.core_type<tc>, window_params = [{transform_indices = @transform_0, window_bounds = array<i64: 16, 32>}, {transform_indices = @transform_1, window_bounds = array<i64: 16, 32>}, {transform_indices = @transform_2, window_bounds = array<i64: 16, 32>}, {transform_indices = @transform_3, window_bounds = array<i64: 1, 128>}]} {
    %c0 = arith.constant 0 : index
    %c0_0 = arith.constant 0 : index
    %0 = vector.load %arg1[%c0, %c0_0] : memref<16x32xf32, #tpu.memory_space<vmem>>, vector<16x32xf32>
    %c0_1 = arith.constant 0 : index
    %c0_2 = arith.constant 0 : index
    %1 = vector.load %arg2[%c0_1, %c0_2] : memref<16x32xf32, #tpu.memory_space<vmem>>, vector<16x32xf32>
    %2 = arith.subf %0, %1 : vector<16x32xf32>
    %cst = arith.constant 9.99999997E-7 : f32
    %3 = vector.broadcast %cst : f32 to vector<16x32xf32>
    %4 = arith.addf %2, %3 : vector<16x32xf32>
    %c0_3 = arith.constant 0 : index
    %c0_4 = arith.constant 0 : index
    %5 = vector.load %arg3[%c0_3, %c0_4] : memref<16x32xf32, #tpu.memory_space<vmem>>, vector<16x32xf32>
    %6 = arith.subf %0, %5 : vector<16x32xf32>
    %cst_5 = arith.constant 9.99999997E-7 : f32
    %7 = vector.broadcast %cst_5 : f32 to vector<16x32xf32>
    %8 = arith.addf %6, %7 : vector<16x32xf32>
    %9 = arith.mulf %4, %4 : vector<16x32xf32>
    %cst_6 = arith.constant dense<0.000000e+00> : vector<16xf32>
    %10 = vector.multi_reduction <add>, %9, %cst_6 [1] : vector<16x32xf32> to vector<16xf32>
    %11 = vector.shape_cast %10 : vector<16xf32> to vector<16x1xf32>
    %12 = math.sqrt %11 : vector<16x1xf32>
    %13 = arith.mulf %8, %8 : vector<16x32xf32>
    %cst_7 = arith.constant dense<0.000000e+00> : vector<16xf32>
    %14 = vector.multi_reduction <add>, %13, %cst_7 [1] : vector<16x32xf32> to vector<16xf32>
    %15 = vector.shape_cast %14 : vector<16xf32> to vector<16x1xf32>
    %16 = math.sqrt %15 : vector<16x1xf32>
    %17 = arith.subf %12, %16 : vector<16x1xf32>
    %cst_8 = arith.constant 0.000000e+00 : f32
    %18 = vector.broadcast %cst_8 : f32 to vector<16x1xf32>
    %19 = arith.maximumf %17, %18 : vector<16x1xf32>
    %20 = math.absf %17 : vector<16x1xf32>
    %cst_9 = arith.constant 0.000000e+00 : f32
    %21 = vector.broadcast %cst_9 : f32 to vector<16x1xf32>
    %22 = arith.subf %21, %20 : vector<16x1xf32>
    %23 = math.exp %22 : vector<16x1xf32>
    %24 = math.log1p %23 : vector<16x1xf32>
    %25 = arith.addf %19, %24 : vector<16x1xf32>
    %c16_i32 = arith.constant 16 : i32
    %26 = arith.muli %arg0, %c16_i32 : i32
    %27 = tpu.iota {dimensions = array<i32: 0>} : vector<16x1xi32>
    %28 = vector.broadcast %26 : i32 to vector<16x1xi32>
    %29 = arith.addi %28, %27 : vector<16x1xi32>
    %c16_i32_10 = arith.constant 16 : i32
    %30 = vector.broadcast %c16_i32_10 : i32 to vector<16x1xi32>
    %31 = arith.cmpi slt, %29, %30 : vector<16x1xi32>
    %cst_11 = arith.constant 0.000000e+00 : f32
    %32 = vector.broadcast %cst_11 : f32 to vector<16x1xf32>
    %33 = arith.select %31, %25, %32 : vector<16x1xi1>, vector<16x1xf32>
    %34 = vector.shape_cast %33 : vector<16x1xf32> to vector<1x16x1xf32>
    %cst_12 = arith.constant dense<0.000000e+00> : vector<1xf32>
    %35 = vector.multi_reduction <add>, %34, %cst_12 [1, 2] : vector<1x16x1xf32> to vector<1xf32>
    %36 = vector.shape_cast %35 : vector<1xf32> to vector<1x1x1xf32>
    %37 = vector.extract %36[0, 0, 0] : f32 from vector<1x1x1xf32>
    %38 = vector.broadcast %37 : f32 to vector<1x128xf32>
    %c0_13 = arith.constant 0 : index
    %c0_14 = arith.constant 0 : index
    %39 = vector.load %arg4[%c0_13, %c0_14] : memref<1x128xf32, #tpu.memory_space<vmem>>, vector<1x128xf32>
    tpu.vector_store %arg4[%c0_13, %c0_14], %38 {strides = array<i32>} : memref<1x128xf32, #tpu.memory_space<vmem>>, vector<1x128xf32>,
    return
  }
  func.func @transform_0(%arg0: i32) -> (i32, i32) {
    %c0_i32 = arith.constant 0 : i32
    %c0_i32_0 = arith.constant 0 : i32
    return %arg0, %c0_i32 : i32, i32
  }
  func.func @transform_1(%arg0: i32) -> (i32, i32) {
    %c0_i32 = arith.constant 0 : i32
    %c0_i32_0 = arith.constant 0 : i32
    return %arg0, %c0_i32 : i32, i32
  }
  func.func @transform_2(%arg0: i32) -> (i32, i32) {
    %c0_i32 = arith.constant 0 : i32
    %c0_i32_0 = arith.constant 0 : i32
    return %arg0, %c0_i32 : i32, i32
  }
  func.func @transform_3(%arg0: i32) -> (i32, i32) {
    %c0_i32 = arith.constant 0 : i32
    %c0_i32_0 = arith.constant 0 : i32
    return %arg0, %c0_i32 : i32, i32
  }
}

</mosaic_0001>

<llo_original>
// kernel: tpu_custom_call.1
$region0: #{tpu_custom_call.1}
  #allocation0 [shape = 'u32[]', space=smem, size = 0x4, offset = 0x4, fixed_abs, tag = 'smem constant byte address 0x4 - core index']
  #allocation1 [shape = 'u32[144,128]{1,0:T(1,128)}', space=vmem, size = 0x12000, scoped, tag = 'internal scratch']
  %s0 = inlined_call_operand.hbm [shape: f32[16,32], index: 0, kind: input, shape index: {}]
  %s1 = inlined_call_operand.hbm [shape: f32[16,32], index: 1, kind: input, shape index: {}]
  %s2 = inlined_call_operand.hbm [shape: f32[16,32], index: 2, kind: input, shape index: {}]
  %s3 = inlined_call_operand.hbm [shape: f32[1,128], index: 3, kind: output, shape index: {}]
  %s4 = sld [smem:[#allocation0]]
  $region34: #{tpu_custom_call.1} parent=0
    _
  %s6 = ssub.s32 1, %s4
  %s7 = scalar_select 0, %s6, %s4
  $region1: #{tpu_custom_call.1} parent=0
    #allocation2 [shape = 'u8[8192]{0}', space=vmem, size = 0x2000, scoped, tag = 'input window, operand 0, single buffered']
    #allocation3 [shape = 's32[1]{0}', space=sflag, size = 0x4, scoped, tag = 'scoped memory for tpu_custom_call.1']
    #allocation4 [shape = 's32[1]{0}', space=sflag, size = 0x4, scoped, tag = 'scoped memory for tpu_custom_call.1']
    #allocation5 [shape = 'u8[8192]{0}', space=vmem, size = 0x2000, scoped, tag = 'input window, operand 1, single buffered']
    #allocation6 [shape = 's32[1]{0}', space=sflag, size = 0x4, scoped, tag = 'scoped memory for tpu_custom_call.1']
    #allocation7 [shape = 'u8[8192]{0}', space=vmem, size = 0x2000, scoped, tag = 'input window, operand 2, single buffered']
    #allocation8 [shape = 'u8[512]{0}', space=vmem, size = 0x400, scoped, tag = 'output window, operand 0, single buffered']
    %8 = vsyncpa [#allocation3], 0
    %9 = vsyncpa [#allocation6], 0
    %10 = vsyncpa [#allocation4], 0
    // Predicated region
    $region2: #{tpu_custom_call.1} parent=1 // pred_check
      _
    $region3: #{tpu_custom_call.1} parent=1 // pred_check_branch
      %12 = sbr.rel (0) target = $region5
    $region4: #{tpu_custom_call.1} parent=1 // pred_region
      %s14 = ssub.s32 256, 256
      %15 = vsyncadd [#allocation3], %s14
      %s16 = sshll.u32 [#allocation2], 4
      %s17 = int_to_ptr.vmem [resolvable:$true] %s16
      %22 = dma.hbm_to_vmem [thread:$0]  %s0, 256, %s17, [#allocation3], 128, 128, 8
    $region5: #{tpu_custom_call.1} parent=1 // pred_fallthru
      _
    // Predicated region
    $region6: #{tpu_custom_call.1} parent=1 // pred_check
      _
    $region7: #{tpu_custom_call.1} parent=1 // pred_check_branch
      %24 = sbr.rel (0) target = $region9
    $region8: #{tpu_custom_call.1} parent=1 // pred_region
      %s26 = ssub.s32 256, 256
      %27 = vsyncadd [#allocation6], %s26
      %s28 = sshll.u32 [#allocation5], 4
      %s29 = int_to_ptr.vmem [resolvable:$true] %s28
      %34 = dma.hbm_to_vmem [thread:$0]  %s1, 256, %s29, [#allocation6], 128, 128, 8
    $region9: #{tpu_custom_call.1} parent=1 // pred_fallthru
      _
    // Predicated region
    $region10: #{tpu_custom_call.1} parent=1 // pred_check
      _
    $region11: #{tpu_custom_call.1} parent=1 // pred_check_branch
      %36 = sbr.rel (0) target = $region13
    $region12: #{tpu_custom_call.1} parent=1 // pred_region
      %s38 = ssub.s32 256, 256
      %39 = vsyncadd [#allocation6], %s38
      %s40 = sshll.u32 [#allocation7], 4
      %s41 = int_to_ptr.vmem [resolvable:$true] %s40
      %46 = dma.hbm_to_vmem [thread:$0]  %s2, 256, %s41, [#allocation6], 128, 128, 8
    $region13: #{tpu_custom_call.1} parent=1 // pred_fallthru
      _
    // Predicated region
    $region14: #{tpu_custom_call.1} parent=1 // pred_check
      _
    $region15: #{tpu_custom_call.1} parent=1 // pred_check_branch
      %48 = sbr.rel (0) target = $region17
    $region16: #{tpu_custom_call.1} parent=1 // pred_region
      %49 = dma.done [#allocation3], 256
    $region17: #{tpu_custom_call.1} parent=1 // pred_fallthru
      _
    // Predicated region
    $region18: #{tpu_custom_call.1} parent=1 // pred_check
      _
    $region19: #{tpu_custom_call.1} parent=1 // pred_check_branch
      %51 = sbr.rel (0) target = $region21
    $region20: #{tpu_custom_call.1} parent=1 // pred_region
      %52 = dma.done [#allocation6], 256
    $region21: #{tpu_custom_call.1} parent=1 // pred_fallthru
      _
    // Predicated region
    $region22: #{tpu_custom_call.1} parent=1 // pred_check
      _
    $region23: #{tpu_custom_call.1} parent=1 // pred_check_branch
      %54 = sbr.rel (0) target = $region25
    $region24: #{tpu_custom_call.1} parent=1 // pred_region
      %55 = dma.done [#allocation6], 256
    $region25: #{tpu_custom_call.1} parent=1 // pred_fallthru
      _
    %v56 = vld [vmem:[#allocation2] sm:$0xff]
    %v57 = vld [vmem:[#allocation2 + $0x8] sm:$0xff]
    %v58 = vld [vmem:[#allocation5] sm:$0xff]
    %v59 = vld [vmem:[#allocation5 + $0x8] sm:$0xff]
    %v60 = vsub.f32 %v56, %v58
    %v61 = vsub.f32 %v57, %v59
    %v62 = vadd.f32 %v60, 1e-06
    %v63 = vadd.f32 %v61, 1e-06
    %v64 = vld [vmem:[#allocation7] sm:$0xff]
    %v65 = vld [vmem:[#allocation7 + $0x8] sm:$0xff]
    %v66 = vsub.f32 %v56, %v64
    %v67 = vsub.f32 %v57, %v65
    %v68 = vadd.f32 %v66, 1e-06
    %v69 = vadd.f32 %v67, 1e-06
    %v70 = vmul.f32 %v62, %v62
    %v71 = vmul.f32 %v63, %v63
    %vm72 = vcmask 261120
    %v73 = vsel %vm72, %v70, 0.0
    %74 = vadd.xlane.f32.xlu0 %v73
    %v75 = vpop.xlane.xlu0 %74
    %v76 = vsel %vm72, %v71, 0.0
    %77 = vadd.xlane.f32.xlu0 %v76
    %v78 = vpop.xlane.xlu0 %77
    %v79 = vrsqrt.pop %v75
    %v80 = vmul.f32 %v75, %v79
    %vm81 = vcmp.eq.f32.partialorder %v75, inf
    %v82 = vsel %vm81, %v75, %v80
    %vm83 = vcmp.eq.f32.partialorder %v75, 0.0
    %v84 = vand.u32 %v75, 2147483648
    %v85 = vsel %vm83, %v84, %v82
    %v86 = vrsqrt.pop %v78
    %v87 = vmul.f32 %v78, %v86
    %vm88 = vcmp.eq.f32.partialorder %v78, inf
    %v89 = vsel %vm88, %v78, %v87
    %vm90 = vcmp.eq.f32.partialorder %v78, 0.0
    %v91 = vand.u32 %v78, 2147483648
    %v92 = vsel %vm90, %v91, %v89
    %v93 = vmul.f32 %v68, %v68
    %v94 = vmul.f32 %v69, %v69
    %v95 = vsel %vm72, %v93, 0.0
    %96 = vadd.xlane.f32.xlu0 %v95
    %v97 = vpop.xlane.xlu0 %96
    %v98 = vsel %vm72, %v94, 0.0
    %99 = vadd.xlane.f32.xlu0 %v98
    %v100 = vpop.xlane.xlu0 %99
    %v101 = vrsqrt.pop %v97
    %v102 = vmul.f32 %v97, %v101
    %vm103 = vcmp.eq.f32.partialorder %v97, inf
    %v104 = vsel %vm103, %v97, %v102
    %vm105 = vcmp.eq.f32.partialorder %v97, 0.0
    %v106 = vand.u32 %v97, 2147483648
    %v107 = vsel %vm105, %v106, %v104
    %v108 = vrsqrt.pop %v100
    %v109 = vmul.f32 %v100, %v108
    %vm110 = vcmp.eq.f32.partialorder %v100, inf
    %v111 = vsel %vm110, %v100, %v109
    %vm112 = vcmp.eq.f32.partialorder %v100, 0.0
    %v113 = vand.u32 %v100, 2147483648
    %v114 = vsel %vm112, %v113, %v111
    %v115 = vsub.f32 %v85, %v107
    %v116 = vsub.f32 %v92, %v114
    %v117 = vmax.f32 %v115, 0.0
    %v118 = vmax.f32 %v116, 0.0
    %v119 = vand.u32 2147483647, %v115
    %v120 = vand.u32 2147483647, %v116
    %v121 = vsub.f32 0.0, %v119
    %v122 = vsub.f32 0.0, %v120
    %v123 = vmul.f32 %v121, 1.442695
    %v124 = vpow.pop %v123
    %v125 = vmul.f32 %v122, 1.442695
    %v126 = vpow.pop %v125
    %v127 = vadd.f32 %v124, 1.0
    %v128 = vlog2.pop %v127
    %v129 = vmul.f32 %v128, 0.6931472
    %v130 = vmul.f32 -0.5, %v124
    %v131 = vadd.f32 %v130, 1.0
    %v132 = vmul.f32 %v131, %v124
    %v133 = vand.u32 2147483647, %v124
    %vm134 = vcmp.lt.f32.partialorder %v133, 0.0004427343
    %v135 = vsel %vm134, %v132, %v129
    %v136 = vadd.f32 %v126, 1.0
    %v137 = vlog2.pop %v136
    %v138 = vmul.f32 %v137, 0.6931472
    %v139 = vmul.f32 -0.5, %v126
    %v140 = vadd.f32 %v139, 1.0
    %v141 = vmul.f32 %v140, %v126
    %v142 = vand.u32 2147483647, %v126
    %vm143 = vcmp.lt.f32.partialorder %v142, 0.0004427343
    %v144 = vsel %vm143, %v141, %v138
    %v145 = vadd.f32 %v117, %v135
    %v146 = vadd.f32 %v118, %v144
    %s147 = smul.u32 0, 16
    %v148 = vlaneseq
    %v149 = vshrl.u32 %v148, 7
    %v150 = vadd.s32 %v149, 8
    %v151 = vstv %s147
    %v152 = vadd.s32 %v151, %v149
    %v153 = vadd.s32 %v151, %v150
    %vm154 = vcmp.lt.s32.totalorder %v152, 16
    %vm155 = vcmp.lt.s32.totalorder %v153, 16
    %v156 = vsel %vm154, %v145, 0.0
    %v157 = vsel %vm155, %v146, 0.0
    %vm158 = vcmask 7168
    %v159 = vsel %vm158, %v156, 0.0
    %v160 = vsel %vm158, %v157, 0.0
    %v161 = vadd.f32 %v159, %v160
    %162 = vadd.xlane.f32.xlu0 %v161
    %v163 = vpop.xlane.xlu0 %162
    %v164 = vrot.slane %v163, 4
    %v165 = vadd.f32 %v163, %v164
    %v166 = vrot.slane %v165, 2
    %v167 = vadd.f32 %v165, %v166
    %v168 = vrot.slane %v167, 1
    %v169 = vadd.f32 %v167, %v168
    %s170 = vtos %v169
    %v171 = vstv %s170
    %172 = vst [vmem:[#allocation8] sm:$0x1] %v171
    // Predicated region
    $region26: #{tpu_custom_call.1} parent=1 // pred_check
      _
    $region27: #{tpu_custom_call.1} parent=1 // pred_check_branch
      %174 = sbr.rel (0) target = $region29
    $region28: #{tpu_custom_call.1} parent=1 // pred_region
      %s176 = ssub.s32 16, 16
      %177 = vsyncadd [#allocation4], %s176
      %s179 = sshll.u32 [#allocation8], 4
      %s180 = int_to_ptr.vmem [resolvable:$true] %s179
      %182 = dma.vmem_to_hbm [thread:$0]  %s180, 16, %s3, [#allocation4]
    $region29: #{tpu_custom_call.1} parent=1 // pred_fallthru
      _
    // Predicated region
    $region30: #{tpu_custom_call.1} parent=1 // pred_check
      _
    $region31: #{tpu_custom_call.1} parent=1 // pred_check_branch
      %184 = sbr.rel (0) target = $region33
    $region32: #{tpu_custom_call.1} parent=1 // pred_region
      %185 = dma.done [#allocation4], 16
    $region33: #{tpu_custom_call.1} parent=1 // pred_fallthru
      _
    %186 = vsyncpa [#allocation3], 1
    %187 = vsyncpa [#allocation6], 1
    %188 = vsyncpa [#allocation4], 1

</llo_original>
